<compile_context>
chip_gen: v7x
topology: tpu7x:2x2x1
jax: 0.10.0
libtpu: 0.0.40
codegen_flags: <defaults>
</compile_context>

<pallas_src>
import jax
import jax.numpy as jnp
from jax.experimental import pallas as pl
from jax.experimental.pallas import tpu as pltpu

# utils.N_EFP is not defined in the snippet; pick a deterministic, lane-friendly
# value for this synthetic kernel.
N_EFP = 128
LATENT_SIZE = 32


def net_kernel(x_ref, weT_ref, be_ref, wdT_ref, bd_ref, o_ref):
    # x_ref  : (Bt, N_EFP)
    # weT_ref: (N_EFP, LATENT)   -- encoder weight, pre-transposed (in, out)
    # be_ref : (1, LATENT)
    # wdT_ref: (LATENT, N_EFP)   -- decoder weight, pre-transposed (in, out)
    # bd_ref : (1, N_EFP)
    # o_ref  : (Bt, N_EFP)
    x = x_ref[...]

    # Encoder: h = sigmoid(x @ W_E^T + b_E)  -> (Bt, LATENT), f32 accumulation.
    h = jnp.dot(x, weT_ref[...], preferred_element_type=jnp.float32)
    h = jax.nn.sigmoid(h + be_ref[...])          # bias broadcast over batch rows

    # Decoder: y = tanh(h @ W_D^T + b_D)  -> (Bt, N_EFP)
    y = jnp.dot(h, wdT_ref[...], preferred_element_type=jnp.float32)
    o_ref[...] = jnp.tanh(y + bd_ref[...]).astype(o_ref.dtype)


def net_forward(x, enc_wT, enc_b2, dec_wT, dec_b2, *, batch_tile=2048):
    """Fused Net forward.

    x:      (B, N_EFP)
    enc_wT: (N_EFP, LATENT)   encoder weight, pre-transposed once at init
    enc_b2: (1, LATENT)
    dec_wT: (LATENT, N_EFP)   decoder weight, pre-transposed once at init
    dec_b2: (1, N_EFP)
    """
    B, nefp = x.shape
    latent = enc_wT.shape[1]

    if B <= batch_tile:
        # Small batch: whole problem (<= ~4 MiB for the default tile) lives in
        # VMEM — no grid, no pipeline prologue/epilogue overhead.
        return pl.pallas_call(
            net_kernel,
            out_shape=jax.ShapeDtypeStruct((B, nefp), x.dtype),
            in_specs=[pl.BlockSpec(memory_space=pltpu.MemorySpace.VMEM)] * 5,
            out_specs=pl.BlockSpec(memory_space=pltpu.MemorySpace.VMEM),
        )(x, enc_wT, enc_b2, dec_wT, dec_b2)

    # Large batch: pad to a whole number of tiles (ragged B included), stream
    # the batch dimension. Weights/biases are tiny and stay grid-resident.
    num_tiles = pl.cdiv(B, batch_tile)
    b_pad = num_tiles * batch_tile
    x_in = x if b_pad == B else jnp.pad(x, ((0, b_pad - B), (0, 0)))

    # Explicit scoped-VMEM bump only needed for very large tiles (v5e's default
    # scoped limit is 16 MiB); the default 2048-row tile never triggers this.
    itemsize = jnp.dtype(x.dtype).itemsize
    compiler_kwargs = {}
    if batch_tile > 4096:
        per_step = 2 * 2 * batch_tile * nefp * itemsize  # x+out, double-buffered
        compiler_kwargs["vmem_limit_bytes"] = int(min(per_step + (4 << 20), 64 << 20))

    out = pl.pallas_call(
        net_kernel,
        out_shape=jax.ShapeDtypeStruct((b_pad, nefp), x.dtype),
        grid=(num_tiles,),
        in_specs=[
            pl.BlockSpec((batch_tile, nefp), lambda i: (i, 0)),
            pl.BlockSpec((nefp, latent), lambda i: (0, 0)),
            pl.BlockSpec((1, latent), lambda i: (0, 0)),
            pl.BlockSpec((latent, nefp), lambda i: (0, 0)),
            pl.BlockSpec((1, nefp), lambda i: (0, 0)),
        ],
        out_specs=pl.BlockSpec((batch_tile, nefp), lambda i: (i, 0)),
        compiler_params=pltpu.CompilerParams(
            dimension_semantics=("parallel",),  # lets v7x shard steps across 2 TCs
            **compiler_kwargs),
    )(x_in, enc_wT, enc_b2, dec_wT, dec_b2)

    return out if b_pad == B else out[:B]


def _reference(x, enc_wT, enc_b2, dec_wT, dec_b2):
    h = jax.nn.sigmoid(x @ enc_wT + enc_b2)
    return jnp.tanh(h @ dec_wT + dec_b2)


if __name__ == "__main__":
    key = jax.random.PRNGKey(0)
    kx, kx2, kx3, kwe, kbe, kwd, kbd = jax.random.split(key, 7)

    # Deterministic parameter init mimicking nn.Linear default U[-1/sqrt(in), 1/sqrt(in)].
    enc_bound = 1.0 / (N_EFP ** 0.5)        # Encoder: in_features = N_EFP
    dec_bound = 1.0 / (LATENT_SIZE ** 0.5)  # Decoder: in_features = LATENT_SIZE

    # PyTorch (out, in) layout ...
    enc_w = jax.random.uniform(kwe, (LATENT_SIZE, N_EFP), jnp.float32,
                               minval=-enc_bound, maxval=enc_bound)
    dec_w = jax.random.uniform(kwd, (N_EFP, LATENT_SIZE), jnp.float32,
                               minval=-dec_bound, maxval=dec_bound)
    # ... transposed ONCE here (outside any pallas_call / hot loop).
    enc_wT = jnp.transpose(enc_w)           # (N_EFP, LATENT)
    dec_wT = jnp.transpose(dec_w)           # (LATENT, N_EFP)
    # Biases stored once as (1, N) — no per-call reshape in the hot path.
    enc_b2 = jax.random.uniform(kbe, (1, LATENT_SIZE), jnp.float32,
                                minval=-enc_bound, maxval=enc_bound)
    dec_b2 = jax.random.uniform(kbd, (1, N_EFP), jnp.float32,
                                minval=-dec_bound, maxval=dec_bound)

    # --- small batch: gridless path ---
    B = 8
    x = jax.random.normal(kx, (B, N_EFP), jnp.float32)
    out = jax.block_until_ready(net_forward(x, enc_wT, enc_b2, dec_wT, dec_b2))
    ref = _reference(x, enc_wT, enc_b2, dec_wT, dec_b2)
    assert out.shape == (B, N_EFP)
    assert jnp.allclose(out, ref, atol=1e-4, rtol=1e-4), "small-batch mismatch"

    # --- divisible batch: tiled parallel-grid path (small tile just for test) ---
    B2 = 512
    x2 = jax.random.normal(kx2, (B2, N_EFP), jnp.float32)
    out2 = jax.block_until_ready(
        net_forward(x2, enc_wT, enc_b2, dec_wT, dec_b2, batch_tile=256))
    ref2 = _reference(x2, enc_wT, enc_b2, dec_wT, dec_b2)
    assert out2.shape == (B2, N_EFP)
    assert jnp.allclose(out2, ref2, atol=1e-4, rtol=1e-4), "tiled-batch mismatch"

    # --- ragged batch: cdiv grid + padded last tile path ---
    B3 = 600
    x3 = jax.random.normal(kx3, (B3, N_EFP), jnp.float32)
    out3 = jax.block_until_ready(
        net_forward(x3, enc_wT, enc_b2, dec_wT, dec_b2, batch_tile=256))
    ref3 = _reference(x3, enc_wT, enc_b2, dec_wT, dec_b2)
    assert out3.shape == (B3, N_EFP)
    assert jnp.allclose(out3, ref3, atol=1e-4, rtol=1e-4), "ragged-batch mismatch"

    print("KERNEL_OK")
</pallas_src>

<mosaic_0001>
module attributes {stable_mosaic.version = 11 : i64} {
  func.func @net_kernel(%arg0: memref<8x128xf32, #tpu.memory_space<vmem>>, %arg1: memref<128x32xf32, #tpu.memory_space<vmem>>, %arg2: memref<1x32xf32, #tpu.memory_space<vmem>>, %arg3: memref<32x128xf32, #tpu.memory_space<vmem>>, %arg4: memref<1x128xf32, #tpu.memory_space<vmem>>, %arg5: memref<8x128xf32, #tpu.memory_space<vmem>>) attributes {dimension_semantics = [], scalar_prefetch = 0 : i64, scratch_operands = 0 : i64, tpu.core_type = #tpu.core_type<tc>} {
    %c0 = arith.constant 0 : index
    %c0_0 = arith.constant 0 : index
    %0 = vector.load %arg0[%c0, %c0_0] : memref<8x128xf32, #tpu.memory_space<vmem>>, vector<8x128xf32>
    %c0_1 = arith.constant 0 : index
    %c0_2 = arith.constant 0 : index
    %1 = vector.load %arg1[%c0_1, %c0_2] : memref<128x32xf32, #tpu.memory_space<vmem>>, vector<128x32xf32>
    %cst = arith.constant dense<0.000000e+00> : vector<8x32xf32>
    %2 = tpu.matmul %0, %1, %cst {dimension_numbers = #tpu.dot_dimension_numbers<[1], [0], [0], [1], [0, 0, 1, 1], [], []>} : vector<8x128xf32>, vector<128x32xf32>, vector<8x32xf32> -> vector<8x32xf32>
    %c0_3 = arith.constant 0 : index
    %c0_4 = arith.constant 0 : index
    %3 = vector.load %arg2[%c0_3, %c0_4] : memref<1x32xf32, #tpu.memory_space<vmem>>, vector<1x32xf32>
    %4 = vector.broadcast %3 : vector<1x32xf32> to vector<8x32xf32>
    %5 = arith.addf %2, %4 : vector<8x32xf32>
    %6 = arith.negf %5 : vector<8x32xf32>
    %7 = math.exp %6 : vector<8x32xf32>
    %cst_5 = arith.constant 1.000000e+00 : f32
    %8 = vector.broadcast %cst_5 : f32 to vector<8x32xf32>
    %9 = arith.addf %8, %7 : vector<8x32xf32>
    %10 = arith.divf %8, %9 : vector<8x32xf32>
    %c0_6 = arith.constant 0 : index
    %c0_7 = arith.constant 0 : index
    %11 = vector.load %arg3[%c0_6, %c0_7] : memref<32x128xf32, #tpu.memory_space<vmem>>, vector<32x128xf32>
    %cst_8 = arith.constant dense<0.000000e+00> : vector<8x128xf32>
    %12 = tpu.matmul %10, %11, %cst_8 {dimension_numbers = #tpu.dot_dimension_numbers<[1], [0], [0], [1], [0, 0, 1, 1], [], []>} : vector<8x32xf32>, vector<32x128xf32>, vector<8x128xf32> -> vector<8x128xf32>
    %c0_9 = arith.constant 0 : index
    %c0_10 = arith.constant 0 : index
    %13 = vector.load %arg4[%c0_9, %c0_10] : memref<1x128xf32, #tpu.memory_space<vmem>>, vector<1x128xf32>
    %14 = vector.broadcast %13 : vector<1x128xf32> to vector<8x128xf32>
    %15 = arith.addf %12, %14 : vector<8x128xf32>
    %16 = math.tanh %15 : vector<8x128xf32>
    %c0_11 = arith.constant 0 : index
    %c0_12 = arith.constant 0 : index
    %17 = vector.load %arg5[%c0_11, %c0_12] : memref<8x128xf32, #tpu.memory_space<vmem>>, vector<8x128xf32>
    tpu.vector_store %arg5[%c0_11, %c0_12], %16 {strides = array<i32>} : memref<8x128xf32, #tpu.memory_space<vmem>>, vector<8x128xf32>,
    return
  }
}

</mosaic_0001>

<llo_original>
// kernel: tpu_custom_call.1
$region0: #{tpu_custom_call.1}
  #allocation0 [shape = 'u32[]', space=smem, size = 0x4, offset = 0x4, fixed_abs, tag = 'smem constant byte address 0x4 - core index']
  #allocation1 [shape = 'u32[144,128]{1,0:T(1,128)}', space=vmem, size = 0x12000, scoped, tag = 'internal scratch']
  %s0 = inlined_call_operand.vmem [shape: f32[8,128], index: 0, kind: input, shape index: {}]
  %s1 = inlined_call_operand.vmem [shape: f32[128,32], index: 1, kind: input, shape index: {}]
  %s2 = inlined_call_operand.vmem [shape: f32[1,32], index: 2, kind: input, shape index: {}]
  %s3 = inlined_call_operand.vmem [shape: f32[32,128], index: 3, kind: input, shape index: {}]
  %s4 = inlined_call_operand.vmem [shape: f32[1,128], index: 4, kind: input, shape index: {}]
  %s5 = inlined_call_operand.hbm [shape: f32[8,128], index: 5, kind: output, shape index: {}]
  %s6 = sld [smem:[#allocation0]]
  $region30: #{tpu_custom_call.1} parent=0
    _
  %s8 = ssub.s32 1, %s6
  %s9 = scalar_select 0, %s8, %s6
  $region1: #{tpu_custom_call.1} parent=0
    #allocation2 [shape = 'u8[4096]{0}', space=vmem, size = 0x1000, scoped, tag = 'output window, operand 0, single buffered']
    #allocation3 [shape = 's32[1]{0}', space=sflag, size = 0x4, scoped, tag = 'scoped memory for tpu_custom_call.1']
    %10 = vsyncpa [#allocation3], 0
    // Predicated region
    $region2: #{tpu_custom_call.1} parent=1 // pred_check
      _
    $region3: #{tpu_custom_call.1} parent=1 // pred_check_branch
      %12 = sbr.rel (0) target = $region5
    $region4: #{tpu_custom_call.1} parent=1 // pred_region
      _
    $region5: #{tpu_custom_call.1} parent=1 // pred_fallthru
      _
    // Predicated region
    $region6: #{tpu_custom_call.1} parent=1 // pred_check
      _
    $region7: #{tpu_custom_call.1} parent=1 // pred_check_branch
      %14 = sbr.rel (0) target = $region9
    $region8: #{tpu_custom_call.1} parent=1 // pred_region
      _
    $region9: #{tpu_custom_call.1} parent=1 // pred_fallthru
      _
    // Predicated region
    $region10: #{tpu_custom_call.1} parent=1 // pred_check
      _
    $region11: #{tpu_custom_call.1} parent=1 // pred_check_branch
      %16 = sbr.rel (0) target = $region13
    $region12: #{tpu_custom_call.1} parent=1 // pred_region
      _
    $region13: #{tpu_custom_call.1} parent=1 // pred_fallthru
      _
    // Predicated region
    $region14: #{tpu_custom_call.1} parent=1 // pred_check
      _
    $region15: #{tpu_custom_call.1} parent=1 // pred_check_branch
      %18 = sbr.rel (0) target = $region17
    $region16: #{tpu_custom_call.1} parent=1 // pred_region
      _
    $region17: #{tpu_custom_call.1} parent=1 // pred_fallthru
      _
    // Predicated region
    $region18: #{tpu_custom_call.1} parent=1 // pred_check
      _
    $region19: #{tpu_custom_call.1} parent=1 // pred_check_branch
      %20 = sbr.rel (0) target = $region21
    $region20: #{tpu_custom_call.1} parent=1 // pred_region
      _
    $region21: #{tpu_custom_call.1} parent=1 // pred_fallthru
      _
    %v21 = vld [vmem:[%s0] sm:$0xff]
    %v22 = vld [vmem:[%s1] sm:$0xff]
    %v23 = vld [vmem:[%s1 + $0x8] sm:$0xff]
    %v24 = vld [vmem:[%s1 + $0x10] sm:$0xff]
    %v25 = vld [vmem:[%s1 + $0x18] sm:$0xff]
    %v26 = vld [vmem:[%s1 + $0x20] sm:$0xff]
    %v27 = vld [vmem:[%s1 + $0x28] sm:$0xff]
    %v28 = vld [vmem:[%s1 + $0x30] sm:$0xff]
    %v29 = vld [vmem:[%s1 + $0x38] sm:$0xff]
    %v30 = vld [vmem:[%s1 + $0x40] sm:$0xff]
    %v31 = vld [vmem:[%s1 + $0x48] sm:$0xff]
    %v32 = vld [vmem:[%s1 + $0x50] sm:$0xff]
    %v33 = vld [vmem:[%s1 + $0x58] sm:$0xff]
    %v34 = vld [vmem:[%s1 + $0x60] sm:$0xff]
    %v35 = vld [vmem:[%s1 + $0x68] sm:$0xff]
    %v36 = vld [vmem:[%s1 + $0x70] sm:$0xff]
    %v37 = vld [vmem:[%s1 + $0x78] sm:$0xff]
    %v38 = vld [vmem:[%s2] sm:$0x1]
    %v40 = vlaneseq
    %v41 = vshrl.u32 %v40, 7
    %v42 = vsub.s32 0, %v41
    %v43 = vrot.slane %v38, %v42
    %45 = vmatprep.subr.mxu0 0.0
    %46 = vmatpush1.msra.mxu0 %v22
    %47 = vmatprep.subr.mxu0 0.0
    %48 = vmatpush1.msra.mxu0 %v23
    %49 = vmatprep.subr.mxu0 0.0
    %50 = vmatpush1.msra.mxu0 %v24
    %51 = vmatprep.subr.mxu0 0.0
    %52 = vmatpush1.msra.mxu0 %v25
    %53 = vmatprep.subr.mxu0 0.0
    %54 = vmatpush1.msra.mxu0 %v26
    %55 = vmatprep.subr.mxu0 0.0
    %56 = vmatpush1.msra.mxu0 %v27
    %57 = vmatprep.subr.mxu0 0.0
    %58 = vmatpush1.msra.mxu0 %v28
    %59 = vmatprep.subr.mxu0 0.0
    %60 = vmatpush1.msra.mxu0 %v29
    %61 = vmatprep.subr.mxu0 0.0
    %62 = vmatpush1.msra.mxu0 %v30
    %63 = vmatprep.subr.mxu0 0.0
    %64 = vmatpush1.msra.mxu0 %v31
    %65 = vmatprep.subr.mxu0 0.0
    %66 = vmatpush1.msra.mxu0 %v32
    %67 = vmatprep.subr.mxu0 0.0
    %68 = vmatpush1.msra.mxu0 %v33
    %69 = vmatprep.subr.mxu0 0.0
    %70 = vmatpush1.msra.mxu0 %v34
    %71 = vmatprep.subr.mxu0 0.0
    %72 = vmatpush1.msra.mxu0 %v35
    %73 = vmatprep.subr.mxu0 0.0
    %74 = vmatpush1.msra.mxu0 %v36
    %75 = vmatprep.subr.mxu0 0.0
    %76 = vmatpush1.msra.mxu0 %v37
    %77 = vmatprep.subr.mxu0 0.0
    %78 = vmatpush1.msra.mxu0 0.0
    %79 = vmatprep.subr.mxu0 0.0
    %80 = vmatpush1.msra.mxu0 0.0
    %81 = vmatprep.subr.mxu0 0.0
    %82 = vmatpush1.msra.mxu0 0.0
    %83 = vmatprep.subr.mxu0 0.0
    %84 = vmatpush1.msra.mxu0 0.0
    %85 = vmatprep.subr.mxu0 0.0
    %86 = vmatpush1.msra.mxu0 0.0
    %87 = vmatprep.subr.mxu0 0.0
    %88 = vmatpush1.msra.mxu0 0.0
    %89 = vmatprep.subr.mxu0 0.0
    %90 = vmatpush1.msra.mxu0 0.0
    %91 = vmatprep.subr.mxu0 0.0
    %92 = vmatpush1.msra.mxu0 0.0
    %93 = vmatprep.subr.mxu0 0.0
    %94 = vmatpush1.msra.mxu0 0.0
    %95 = vmatprep.subr.mxu0 0.0
    %96 = vmatpush1.msra.mxu0 0.0
    %97 = vmatprep.subr.mxu0 0.0
    %98 = vmatpush1.msra.mxu0 0.0
    %99 = vmatprep.subr.mxu0 0.0
    %100 = vmatpush1.msra.mxu0 0.0
    %101 = vmatprep.subr.mxu0 0.0
    %102 = vmatpush1.msra.mxu0 0.0
    %103 = vmatprep.subr.mxu0 0.0
    %104 = vmatpush1.msra.mxu0 0.0
    %105 = vmatprep.subr.mxu0 0.0
    %106 = vmatpush1.msra.mxu0 0.0
    %107 = vmatprep.subr.mxu0 0.0
    %108 = vmatpush1.msra.mxu0 0.0
    %109 = vmatprep.mubr.f32.mxu0 0.0
    %110 = vmatmul.mubr.f32.gmra.mrb[0].mxu0 %v21
    %v111 = vpop.f32.mrb[0].mxu0
    %v112 = vadd.f32 %v43, %v111
    %v113 = vpop.f32.mrb[0].mxu0
    %114 = vdwg.mxu0
    %v115 = vxor.u32 %v112, 2147483648
    %v116 = vmul.f32 %v115, 1.442695
    %v117 = vpow.pop %v116
    %v118 = vadd.f32 %v117, 1.0
    %v119 = vrcp.pop %v118
    %v120 = vmul.f32 1.0, %v119
    %v121 = vld [vmem:[%s3] sm:$0xff]
    %v122 = vld [vmem:[%s3 + $0x8] sm:$0xff]
    %v123 = vld [vmem:[%s3 + $0x10] sm:$0xff]
    %v124 = vld [vmem:[%s3 + $0x18] sm:$0xff]
    %v125 = vld [vmem:[%s4] sm:$0x1]
    %v127 = vlaneseq
    %v128 = vshrl.u32 %v127, 7
    %v129 = vsub.s32 0, %v128
    %v130 = vrot.slane %v125, %v129
    %vm132 = vcmask 261120
    %v134 = vsel %vm132, %v120, 0
    %136 = vmatprep.subr.mxu0 0.0
    %137 = vmatpush1.msra.mxu0 %v121
    %138 = vmatprep.subr.mxu0 0.0
    %139 = vmatpush1.msra.mxu0 %v122
    %140 = vmatprep.subr.mxu0 0.0
    %141 = vmatpush1.msra.mxu0 %v123
    %142 = vmatprep.subr.mxu0 0.0
    %143 = vmatpush1.msra.mxu0 %v124
    %144 = vmatprep.subr.mxu0 0.0
    %145 = vmatpush1.msra.mxu0 0.0
    %146 = vmatprep.subr.mxu0 0.0
    %147 = vmatpush1.msra.mxu0 0.0
    %148 = vmatprep.subr.mxu0 0.0
    %149 = vmatpush1.msra.mxu0 0.0
    %150 = vmatprep.subr.mxu0 0.0
    %151 = vmatpush1.msra.mxu0 0.0
    %152 = vmatprep.subr.mxu0 0.0
    %153 = vmatpush1.msra.mxu0 0.0
    %154 = vmatprep.subr.mxu0 0.0
    %155 = vmatpush1.msra.mxu0 0.0
    %156 = vmatprep.subr.mxu0 0.0
    %157 = vmatpush1.msra.mxu0 0.0
    %158 = vmatprep.subr.mxu0 0.0
    %159 = vmatpush1.msra.mxu0 0.0
    %160 = vmatprep.subr.mxu0 0.0
    %161 = vmatpush1.msra.mxu0 0.0
    %162 = vmatprep.subr.mxu0 0.0
    %163 = vmatpush1.msra.mxu0 0.0
    %164 = vmatprep.subr.mxu0 0.0
    %165 = vmatpush1.msra.mxu0 0.0
    %166 = vmatprep.subr.mxu0 0.0
    %167 = vmatpush1.msra.mxu0 0.0
    %168 = vmatprep.subr.mxu0 0.0
    %169 = vmatpush1.msra.mxu0 0.0
    %170 = vmatprep.subr.mxu0 0.0
    %171 = vmatpush1.msra.mxu0 0.0
    %172 = vmatprep.subr.mxu0 0.0
    %173 = vmatpush1.msra.mxu0 0.0
    %174 = vmatprep.subr.mxu0 0.0
    %175 = vmatpush1.msra.mxu0 0.0
    %176 = vmatprep.subr.mxu0 0.0
    %177 = vmatpush1.msra.mxu0 0.0
    %178 = vmatprep.subr.mxu0 0.0
    %179 = vmatpush1.msra.mxu0 0.0
    %180 = vmatprep.subr.mxu0 0.0
    %181 = vmatpush1.msra.mxu0 0.0
    %182 = vmatprep.subr.mxu0 0.0
    %183 = vmatpush1.msra.mxu0 0.0
    %184 = vmatprep.subr.mxu0 0.0
    %185 = vmatpush1.msra.mxu0 0.0
    %186 = vmatprep.subr.mxu0 0.0
    %187 = vmatpush1.msra.mxu0 0.0
    %188 = vmatprep.subr.mxu0 0.0
    %189 = vmatpush1.msra.mxu0 0.0
    %190 = vmatprep.subr.mxu0 0.0
    %191 = vmatpush1.msra.mxu0 0.0
    %192 = vmatprep.subr.mxu0 0.0
    %193 = vmatpush1.msra.mxu0 0.0
    %194 = vmatprep.subr.mxu0 0.0
    %195 = vmatpush1.msra.mxu0 0.0
    %196 = vmatprep.subr.mxu0 0.0
    %197 = vmatpush1.msra.mxu0 0.0
    %198 = vmatprep.subr.mxu0 0.0
    %199 = vmatpush1.msra.mxu0 0.0
    %200 = vmatprep.mubr.f32.mxu0 0.0
    %201 = vmatmul.mubr.f32.gmra.mrb[0].mxu0 %v134
    %v202 = vpop.f32.mrb[0].mxu0
    %v203 = vadd.f32 %v130, %v202
    %v204 = vpop.f32.mrb[0].mxu0
    %205 = vdwg.mxu0
    %v206 = vtanh.pop %v203
    %207 = vst [vmem:[#allocation2] sm:$0xff] %v206
    // Predicated region
    $region22: #{tpu_custom_call.1} parent=1 // pred_check
      _
    $region23: #{tpu_custom_call.1} parent=1 // pred_check_branch
      %209 = sbr.rel (0) target = $region25
    $region24: #{tpu_custom_call.1} parent=1 // pred_region
      %s211 = ssub.s32 128, 128
      %212 = vsyncadd [#allocation3], %s211
      %s214 = sshll.u32 [#allocation2], 4
      %s215 = int_to_ptr.vmem [resolvable:$true] %s214
      %217 = dma.vmem_to_hbm [thread:$0]  %s215, 128, %s5, [#allocation3]
    $region25: #{tpu_custom_call.1} parent=1 // pred_fallthru
      _
    // Predicated region
    $region26: #{tpu_custom_call.1} parent=1 // pred_check
      _
    $region27: #{tpu_custom_call.1} parent=1 // pred_check_branch
      %219 = sbr.rel (0) target = $region29
    $region28: #{tpu_custom_call.1} parent=1 // pred_region
      %220 = dma.done [#allocation3], 128
    $region29: #{tpu_custom_call.1} parent=1 // pred_fallthru
      _
    %221 = vsyncpa [#allocation3], 1

</llo_original>
